<compile_context>
chip_gen: v7x
topology: tpu7x:2x2x1
jax: 0.10.0
libtpu: 0.0.40
codegen_flags: <defaults>
</compile_context>

<pallas_src>
import functools

import jax
import jax.numpy as jnp
from jax.experimental import pallas as pl
from jax.experimental.pallas import tpu as pltpu

HIDDEN = 256
LN_EPS = 1e-5  # PyTorch LayerNorm default


def _round_up(x, m):
    return (x + m - 1) // m * m


def _layernorm_no_affine(h):
    # var = E[h^2] - E[h]^2: two independent cross-lane reductions (better XLU/VPU
    # overlap) and no separate centering pass before the variance reduction.
    mu = jnp.mean(h, axis=-1, keepdims=True)
    ms = jnp.mean(h * h, axis=-1, keepdims=True)
    var = jnp.maximum(ms - mu * mu, 0.0)
    return (h - mu) * jax.lax.rsqrt(var + LN_EPS)


def _gelu_exact(h):
    # nn.GELU() default: exact erf form (kept to match the PyTorch spec numerics).
    return 0.5 * h * (1.0 + jax.lax.erf(h * 0.7071067811865476))


def modelnet_kernel(f_ref,
                    w1_ref, b1_ref,
                    w2_ref, b2_ref,
                    w3_ref, b3_ref,
                    w4_ref, b4_ref,
                    out_ref):
    # bf16 matmul operands -> native MXU rate; accumulate in f32.
    fb = f_ref[...].astype(jnp.bfloat16)

    # fc1 (single fused [tile, n_in] @ [n_in, 256] dot) + LN + GELU
    h = jnp.dot(fb, w1_ref[...], preferred_element_type=jnp.float32) + b1_ref[...]
    h = _gelu_exact(_layernorm_no_affine(h))

    # fc2 + LN + GELU
    h = (jnp.dot(h.astype(jnp.bfloat16), w2_ref[...],
                 preferred_element_type=jnp.float32) + b2_ref[...])
    h = _gelu_exact(_layernorm_no_affine(h))

    # fc3 + LN + GELU
    h = (jnp.dot(h.astype(jnp.bfloat16), w3_ref[...],
                 preferred_element_type=jnp.float32) + b3_ref[...])
    h = _gelu_exact(_layernorm_no_affine(h))

    # fc4
    out = (jnp.dot(h.astype(jnp.bfloat16), w4_ref[...],
                   preferred_element_type=jnp.float32) + b4_ref[...])

    # GaussianHead: mean passthrough on cols [:half], std = exp(log_std) on [half:].
    # One lane-contiguous output slab; exp is fed 0 on the mean lanes so no spurious
    # inf/NaN can show up in discarded lanes.
    half = out_ref.shape[-1] // 2
    col = jax.lax.broadcasted_iota(jnp.int32, out.shape, 1)
    is_std = col >= half
    out_ref[...] = jnp.where(is_std, jnp.exp(jnp.where(is_std, out, 0.0)), out)


def _const_spec(shape):
    """Spec for a grid-invariant operand (weights/biases): fetch once, single-buffer."""
    idx = lambda i: (0, 0)
    try:
        return pl.BlockSpec(shape, idx, pipeline_mode=pl.Buffered(1))
    except (AttributeError, TypeError):
        # Older Pallas without pipeline_mode/Buffered: plain constant-index spec.
        return pl.BlockSpec(shape, idx)


def modelnet_forward(x, u, params, *, batch_tile=512):
    """x: [B, n_x], u: [B, n_u] -> (mean [B, n_x+1], std [B, n_x+1])."""
    B, n_x = x.shape
    n_u = u.shape[1]
    n_in = n_x + n_u
    n_out = params["w4"].shape[1]
    half = n_out // 2

    # Batch tile: multiple of 8 sublanes, large by default (512) to amortize per-step
    # overhead; clamped to the padded batch so tiny batches still work.
    tile = _round_up(min(batch_tile, _round_up(B, 8)), 8)
    # v7x has 2 TensorCores: if the whole batch fits in one tile but each half is still
    # MXU-filling (>=128 rows), split so the "parallel" axis shards across both cores.
    if B >= 256 and _round_up(B, tile) // tile < 2:
        tile = _round_up((B + 1) // 2, 8)
    Bp = _round_up(B, tile)

    # Fused fc1 input: concat [x|u] host-side (trivial on a [B, n_in] array), pad batch.
    f = jnp.concatenate([x.astype(jnp.float32), u.astype(jnp.float32)], axis=-1)
    if Bp != B:
        f = jnp.pad(f, ((0, Bp - B), (0, 0)))

    # bf16 weights (f32 accumulate on the MXU); biases stay f32.
    w1 = params["w1"].astype(jnp.bfloat16)
    b1 = params["b1"].astype(jnp.float32)
    w2 = params["w2"].astype(jnp.bfloat16)
    b2 = params["b2"].astype(jnp.float32)
    w3 = params["w3"].astype(jnp.bfloat16)
    b3 = params["b3"].astype(jnp.float32)
    w4 = params["w4"].astype(jnp.bfloat16)
    b4 = params["b4"].astype(jnp.float32)

    grid_spec = pltpu.PrefetchScalarGridSpec(
        num_scalar_prefetch=0,
        grid=(Bp // tile,),
        in_specs=[
            pl.BlockSpec((tile, n_in), lambda i: (i, 0)),
            _const_spec((n_in, HIDDEN)), _const_spec((1, HIDDEN)),
            _const_spec((HIDDEN, HIDDEN)), _const_spec((1, HIDDEN)),
            _const_spec((HIDDEN, HIDDEN)), _const_spec((1, HIDDEN)),
            _const_spec((HIDDEN, n_out)), _const_spec((1, n_out)),
        ],
        out_specs=pl.BlockSpec((tile, n_out), lambda i: (i, 0)),
    )

    out = pl.pallas_call(
        modelnet_kernel,
        out_shape=jax.ShapeDtypeStruct((Bp, n_out), jnp.float32),
        grid_spec=grid_spec,
        compiler_params=pltpu.CompilerParams(
            dimension_semantics=("parallel",)),  # batch axis shards across TCs (v7x)
    )(f, w1, b1, w2, b2, w3, b3, w4, b4)

    mean = out[:B, :half]
    std = out[:B, half:]
    return mean, std


def init_params(key, n_x, n_u):
    n_in = n_x + n_u
    n_out = 2 * n_x + 2
    ks = jax.random.split(key, 8)

    def lin(kw, kb, fan_in, fan_out):
        # PyTorch nn.Linear default init: U(-1/sqrt(fan_in), 1/sqrt(fan_in))
        bound = 1.0 / jnp.sqrt(fan_in)
        w = jax.random.uniform(kw, (fan_in, fan_out), jnp.float32, -bound, bound)
        b = jax.random.uniform(kb, (1, fan_out), jnp.float32, -bound, bound)
        return w, b

    w1, b1 = lin(ks[0], ks[1], n_in, HIDDEN)
    w2, b2 = lin(ks[2], ks[3], HIDDEN, HIDDEN)
    w3, b3 = lin(ks[4], ks[5], HIDDEN, HIDDEN)
    w4, b4 = lin(ks[6], ks[7], HIDDEN, n_out)
    return dict(w1=w1, b1=b1, w2=w2, b2=b2, w3=w3, b3=b3, w4=w4, b4=b4)


def _reference(x, u, params):
    """Pure-JAX f32 reference of the same forward pass."""
    f = jnp.concatenate([x, u], axis=-1).astype(jnp.float32)

    def ln(h):
        mu = jnp.mean(h, axis=-1, keepdims=True)
        xc = h - mu
        var = jnp.mean(xc * xc, axis=-1, keepdims=True)
        return xc * jax.lax.rsqrt(var + LN_EPS)

    h = f @ params["w1"] + params["b1"]
    h = _gelu_exact(ln(h))
    h = h @ params["w2"] + params["b2"]
    h = _gelu_exact(ln(h))
    h = h @ params["w3"] + params["b3"]
    h = _gelu_exact(ln(h))
    out = h @ params["w4"] + params["b4"]
    half = out.shape[-1] // 2
    return out[:, :half], jnp.exp(out[:, half:])


def _check(B, n_x, n_u, key, fwd):
    kx, ku, kp = jax.random.split(key, 3)
    x = jax.random.normal(kx, (B, n_x), jnp.float32)
    u = jax.random.normal(ku, (B, n_u), jnp.float32)
    params = init_params(kp, n_x, n_u)

    mean, std = fwd(x, u, params)
    jax.block_until_ready((mean, std))

    assert mean.shape == (B, n_x + 1) and std.shape == (B, n_x + 1)
    assert bool(jnp.all(std > 0))

    ref_mean, ref_std = _reference(x, u, params)
    assert bool(jnp.allclose(mean, ref_mean, rtol=5e-2, atol=5e-2)), "mean mismatch"
    assert bool(jnp.allclose(std, ref_std, rtol=5e-2, atol=5e-2)), "std mismatch"


if __name__ == "__main__":
    key = jax.random.PRNGKey(0)
    n_x, n_u = 4, 2          # e.g. n_x=(4,), n_u=(2,) in the PyTorch ctor

    fwd = jax.jit(functools.partial(modelnet_forward, batch_tile=512))

    # Small batch (not a multiple of 8): tests padding + single-tile path.
    _check(10, n_x, n_u, jax.random.fold_in(key, 1), fwd)
    # Larger batch: tests multi-tile grid (>=2 steps, v7x two-core split) + padding.
    _check(300, n_x, n_u, jax.random.fold_in(key, 2), fwd)

    print("KERNEL_OK")
</pallas_src>

<mosaic_0001>
module attributes {stable_mosaic.version = 11 : i64} {
  func.func @modelnet_kernel(%arg0: i32, %arg1: memref<16x6xf32, #tpu.memory_space<vmem>>, %arg2: memref<6x256xbf16, #tpu.memory_space<vmem>>, %arg3: memref<1x256xf32, #tpu.memory_space<vmem>>, %arg4: memref<256x256xbf16, #tpu.memory_space<vmem>>, %arg5: memref<1x256xf32, #tpu.memory_space<vmem>>, %arg6: memref<256x256xbf16, #tpu.memory_space<vmem>>, %arg7: memref<1x256xf32, #tpu.memory_space<vmem>>, %arg8: memref<256x10xbf16, #tpu.memory_space<vmem>>, %arg9: memref<1x10xf32, #tpu.memory_space<vmem>>, %arg10: memref<16x10xf32, #tpu.memory_space<vmem>>) attributes {dimension_semantics = [#tpu.dimension_semantics<parallel>], iteration_bounds = array<i64: 1>, scalar_prefetch = 0 : i64, scratch_operands = 0 : i64, tpu.core_type = #tpu.core_type<tc>, window_params = [{transform_indices = @transform_0, window_bounds = array<i64: 16, 6>}, {pipeline_mode = #tpu.pipeline_mode<synchronous>, transform_indices = @transform_1, window_bounds = array<i64: 6, 256>}, {pipeline_mode = #tpu.pipeline_mode<synchronous>, transform_indices = @transform_2, window_bounds = array<i64: 1, 256>}, {pipeline_mode = #tpu.pipeline_mode<synchronous>, transform_indices = @transform_3, window_bounds = array<i64: 256, 256>}, {pipeline_mode = #tpu.pipeline_mode<synchronous>, transform_indices = @transform_4, window_bounds = array<i64: 1, 256>}, {pipeline_mode = #tpu.pipeline_mode<synchronous>, transform_indices = @transform_5, window_bounds = array<i64: 256, 256>}, {pipeline_mode = #tpu.pipeline_mode<synchronous>, transform_indices = @transform_6, window_bounds = array<i64: 1, 256>}, {pipeline_mode = #tpu.pipeline_mode<synchronous>, transform_indices = @transform_7, window_bounds = array<i64: 256, 10>}, {pipeline_mode = #tpu.pipeline_mode<synchronous>, transform_indices = @transform_8, window_bounds = array<i64: 1, 10>}, {transform_indices = @transform_9, window_bounds = array<i64: 16, 10>}]} {
    %c0 = arith.constant 0 : index
    %c0_0 = arith.constant 0 : index
    %0 = vector.load %arg1[%c0, %c0_0] : memref<16x6xf32, #tpu.memory_space<vmem>>, vector<16x6xf32>
    %1 = arith.truncf %0 : vector<16x6xf32> to vector<16x6xbf16>
    %c0_1 = arith.constant 0 : index
    %c0_2 = arith.constant 0 : index
    %2 = vector.load %arg2[%c0_1, %c0_2] : memref<6x256xbf16, #tpu.memory_space<vmem>>, vector<6x256xbf16>
    %cst = arith.constant dense<0.000000e+00> : vector<16x256xf32>
    %3 = tpu.matmul %1, %2, %cst {dimension_numbers = #tpu.dot_dimension_numbers<[1], [0], [0], [1], [0, 0, 1, 1], [], []>} : vector<16x6xbf16>, vector<6x256xbf16>, vector<16x256xf32> -> vector<16x256xf32>
    %c0_3 = arith.constant 0 : index
    %c0_4 = arith.constant 0 : index
    %4 = vector.load %arg3[%c0_3, %c0_4] : memref<1x256xf32, #tpu.memory_space<vmem>>, vector<1x256xf32>
    %5 = vector.broadcast %4 : vector<1x256xf32> to vector<16x256xf32>
    %6 = arith.addf %3, %5 : vector<16x256xf32>
    %cst_5 = arith.constant dense<0.000000e+00> : vector<16xf32>
    %7 = vector.multi_reduction <add>, %6, %cst_5 [1] : vector<16x256xf32> to vector<16xf32>
    %8 = vector.shape_cast %7 : vector<16xf32> to vector<16x1xf32>
    %cst_6 = arith.constant 2.560000e+02 : f32
    %9 = vector.broadcast %cst_6 : f32 to vector<16x1xf32>
    %10 = arith.divf %8, %9 : vector<16x1xf32>
    %11 = arith.mulf %6, %6 : vector<16x256xf32>
    %cst_7 = arith.constant dense<0.000000e+00> : vector<16xf32>
    %12 = vector.multi_reduction <add>, %11, %cst_7 [1] : vector<16x256xf32> to vector<16xf32>
    %13 = vector.shape_cast %12 : vector<16xf32> to vector<16x1xf32>
    %cst_8 = arith.constant 2.560000e+02 : f32
    %14 = vector.broadcast %cst_8 : f32 to vector<16x1xf32>
    %15 = arith.divf %13, %14 : vector<16x1xf32>
    %16 = arith.mulf %10, %10 : vector<16x1xf32>
    %17 = arith.subf %15, %16 : vector<16x1xf32>
    %cst_9 = arith.constant 0.000000e+00 : f32
    %18 = vector.broadcast %cst_9 : f32 to vector<16x1xf32>
    %19 = arith.maximumf %17, %18 : vector<16x1xf32>
    %20 = vector.broadcast %10 : vector<16x1xf32> to vector<16x256xf32>
    %21 = arith.subf %6, %20 : vector<16x256xf32>
    %cst_10 = arith.constant 9.99999974E-6 : f32
    %22 = vector.broadcast %cst_10 : f32 to vector<16x1xf32>
    %23 = arith.addf %19, %22 : vector<16x1xf32>
    %24 = math.rsqrt %23 : vector<16x1xf32>
    %25 = vector.broadcast %24 : vector<16x1xf32> to vector<16x256xf32>
    %26 = arith.mulf %21, %25 : vector<16x256xf32>
    %cst_11 = arith.constant 5.000000e-01 : f32
    %27 = vector.broadcast %cst_11 : f32 to vector<16x256xf32>
    %28 = arith.mulf %27, %26 : vector<16x256xf32>
    %cst_12 = arith.constant 0.707106769 : f32
    %29 = vector.broadcast %cst_12 : f32 to vector<16x256xf32>
    %30 = arith.mulf %26, %29 : vector<16x256xf32>
    %31 = math.erf %30 : vector<16x256xf32>
    %cst_13 = arith.constant 1.000000e+00 : f32
    %32 = vector.broadcast %cst_13 : f32 to vector<16x256xf32>
    %33 = arith.addf %32, %31 : vector<16x256xf32>
    %34 = arith.mulf %28, %33 : vector<16x256xf32>
    %35 = arith.truncf %34 : vector<16x256xf32> to vector<16x256xbf16>
    %c0_14 = arith.constant 0 : index
    %c0_15 = arith.constant 0 : index
    %36 = vector.load %arg4[%c0_14, %c0_15] : memref<256x256xbf16, #tpu.memory_space<vmem>>, vector<256x256xbf16>
    %cst_16 = arith.constant dense<0.000000e+00> : vector<16x256xf32>
    %37 = tpu.matmul %35, %36, %cst_16 {dimension_numbers = #tpu.dot_dimension_numbers<[1], [0], [0], [1], [0, 0, 1, 1], [], []>} : vector<16x256xbf16>, vector<256x256xbf16>, vector<16x256xf32> -> vector<16x256xf32>
    %c0_17 = arith.constant 0 : index
    %c0_18 = arith.constant 0 : index
    %38 = vector.load %arg5[%c0_17, %c0_18] : memref<1x256xf32, #tpu.memory_space<vmem>>, vector<1x256xf32>
    %39 = vector.broadcast %38 : vector<1x256xf32> to vector<16x256xf32>
    %40 = arith.addf %37, %39 : vector<16x256xf32>
    %cst_19 = arith.constant dense<0.000000e+00> : vector<16xf32>
    %41 = vector.multi_reduction <add>, %40, %cst_19 [1] : vector<16x256xf32> to vector<16xf32>
    %42 = vector.shape_cast %41 : vector<16xf32> to vector<16x1xf32>
    %cst_20 = arith.constant 2.560000e+02 : f32
    %43 = vector.broadcast %cst_20 : f32 to vector<16x1xf32>
    %44 = arith.divf %42, %43 : vector<16x1xf32>
    %45 = arith.mulf %40, %40 : vector<16x256xf32>
    %cst_21 = arith.constant dense<0.000000e+00> : vector<16xf32>
    %46 = vector.multi_reduction <add>, %45, %cst_21 [1] : vector<16x256xf32> to vector<16xf32>
    %47 = vector.shape_cast %46 : vector<16xf32> to vector<16x1xf32>
    %cst_22 = arith.constant 2.560000e+02 : f32
    %48 = vector.broadcast %cst_22 : f32 to vector<16x1xf32>
    %49 = arith.divf %47, %48 : vector<16x1xf32>
    %50 = arith.mulf %44, %44 : vector<16x1xf32>
    %51 = arith.subf %49, %50 : vector<16x1xf32>
    %cst_23 = arith.constant 0.000000e+00 : f32
    %52 = vector.broadcast %cst_23 : f32 to vector<16x1xf32>
    %53 = arith.maximumf %51, %52 : vector<16x1xf32>
    %54 = vector.broadcast %44 : vector<16x1xf32> to vector<16x256xf32>
    %55 = arith.subf %40, %54 : vector<16x256xf32>
    %cst_24 = arith.constant 9.99999974E-6 : f32
    %56 = vector.broadcast %cst_24 : f32 to vector<16x1xf32>
    %57 = arith.addf %53, %56 : vector<16x1xf32>
    %58 = math.rsqrt %57 : vector<16x1xf32>
    %59 = vector.broadcast %58 : vector<16x1xf32> to vector<16x256xf32>
    %60 = arith.mulf %55, %59 : vector<16x256xf32>
    %cst_25 = arith.constant 5.000000e-01 : f32
    %61 = vector.broadcast %cst_25 : f32 to vector<16x256xf32>
    %62 = arith.mulf %61, %60 : vector<16x256xf32>
    %cst_26 = arith.constant 0.707106769 : f32
    %63 = vector.broadcast %cst_26 : f32 to vector<16x256xf32>
    %64 = arith.mulf %60, %63 : vector<16x256xf32>
    %65 = math.erf %64 : vector<16x256xf32>
    %cst_27 = arith.constant 1.000000e+00 : f32
    %66 = vector.broadcast %cst_27 : f32 to vector<16x256xf32>
    %67 = arith.addf %66, %65 : vector<16x256xf32>
    %68 = arith.mulf %62, %67 : vector<16x256xf32>
    %69 = arith.truncf %68 : vector<16x256xf32> to vector<16x256xbf16>
    %c0_28 = arith.constant 0 : index
    %c0_29 = arith.constant 0 : index
    %70 = vector.load %arg6[%c0_28, %c0_29] : memref<256x256xbf16, #tpu.memory_space<vmem>>, vector<256x256xbf16>
    %cst_30 = arith.constant dense<0.000000e+00> : vector<16x256xf32>
    %71 = tpu.matmul %69, %70, %cst_30 {dimension_numbers = #tpu.dot_dimension_numbers<[1], [0], [0], [1], [0, 0, 1, 1], [], []>} : vector<16x256xbf16>, vector<256x256xbf16>, vector<16x256xf32> -> vector<16x256xf32>
    %c0_31 = arith.constant 0 : index
    %c0_32 = arith.constant 0 : index
    %72 = vector.load %arg7[%c0_31, %c0_32] : memref<1x256xf32, #tpu.memory_space<vmem>>, vector<1x256xf32>
    %73 = vector.broadcast %72 : vector<1x256xf32> to vector<16x256xf32>
    %74 = arith.addf %71, %73 : vector<16x256xf32>
    %cst_33 = arith.constant dense<0.000000e+00> : vector<16xf32>
    %75 = vector.multi_reduction <add>, %74, %cst_33 [1] : vector<16x256xf32> to vector<16xf32>
    %76 = vector.shape_cast %75 : vector<16xf32> to vector<16x1xf32>
    %cst_34 = arith.constant 2.560000e+02 : f32
    %77 = vector.broadcast %cst_34 : f32 to vector<16x1xf32>
    %78 = arith.divf %76, %77 : vector<16x1xf32>
    %79 = arith.mulf %74, %74 : vector<16x256xf32>
    %cst_35 = arith.constant dense<0.000000e+00> : vector<16xf32>
    %80 = vector.multi_reduction <add>, %79, %cst_35 [1] : vector<16x256xf32> to vector<16xf32>
    %81 = vector.shape_cast %80 : vector<16xf32> to vector<16x1xf32>
    %cst_36 = arith.constant 2.560000e+02 : f32
    %82 = vector.broadcast %cst_36 : f32 to vector<16x1xf32>
    %83 = arith.divf %81, %82 : vector<16x1xf32>
    %84 = arith.mulf %78, %78 : vector<16x1xf32>
    %85 = arith.subf %83, %84 : vector<16x1xf32>
    %cst_37 = arith.constant 0.000000e+00 : f32
    %86 = vector.broadcast %cst_37 : f32 to vector<16x1xf32>
    %87 = arith.maximumf %85, %86 : vector<16x1xf32>
    %88 = vector.broadcast %78 : vector<16x1xf32> to vector<16x256xf32>
    %89 = arith.subf %74, %88 : vector<16x256xf32>
    %cst_38 = arith.constant 9.99999974E-6 : f32
    %90 = vector.broadcast %cst_38 : f32 to vector<16x1xf32>
    %91 = arith.addf %87, %90 : vector<16x1xf32>
    %92 = math.rsqrt %91 : vector<16x1xf32>
    %93 = vector.broadcast %92 : vector<16x1xf32> to vector<16x256xf32>
    %94 = arith.mulf %89, %93 : vector<16x256xf32>
    %cst_39 = arith.constant 5.000000e-01 : f32
    %95 = vector.broadcast %cst_39 : f32 to vector<16x256xf32>
    %96 = arith.mulf %95, %94 : vector<16x256xf32>
    %cst_40 = arith.constant 0.707106769 : f32
    %97 = vector.broadcast %cst_40 : f32 to vector<16x256xf32>
    %98 = arith.mulf %94, %97 : vector<16x256xf32>
    %99 = math.erf %98 : vector<16x256xf32>
    %cst_41 = arith.constant 1.000000e+00 : f32
    %100 = vector.broadcast %cst_41 : f32 to vector<16x256xf32>
    %101 = arith.addf %100, %99 : vector<16x256xf32>
    %102 = arith.mulf %96, %101 : vector<16x256xf32>
    %103 = arith.truncf %102 : vector<16x256xf32> to vector<16x256xbf16>
    %c0_42 = arith.constant 0 : index
    %c0_43 = arith.constant 0 : index
    %104 = vector.load %arg8[%c0_42, %c0_43] : memref<256x10xbf16, #tpu.memory_space<vmem>>, vector<256x10xbf16>
    %cst_44 = arith.constant dense<0.000000e+00> : vector<16x10xf32>
    %105 = tpu.matmul %103, %104, %cst_44 {dimension_numbers = #tpu.dot_dimension_numbers<[1], [0], [0], [1], [0, 0, 1, 1], [], []>} : vector<16x256xbf16>, vector<256x10xbf16>, vector<16x10xf32> -> vector<16x10xf32>
    %c0_45 = arith.constant 0 : index
    %c0_46 = arith.constant 0 : index
    %106 = vector.load %arg9[%c0_45, %c0_46] : memref<1x10xf32, #tpu.memory_space<vmem>>, vector<1x10xf32>
    %107 = vector.broadcast %106 : vector<1x10xf32> to vector<16x10xf32>
    %108 = arith.addf %105, %107 : vector<16x10xf32>
    %109 = tpu.iota {dimensions = array<i32: 1>} : vector<16x10xi32>
    %c5_i32 = arith.constant 5 : i32
    %110 = vector.broadcast %c5_i32 : i32 to vector<16x10xi32>
    %111 = arith.cmpi sge, %109, %110 : vector<16x10xi32>
    %cst_47 = arith.constant 0.000000e+00 : f32
    %112 = vector.broadcast %cst_47 : f32 to vector<16x10xf32>
    %113 = arith.select %111, %108, %112 : vector<16x10xi1>, vector<16x10xf32>
    %114 = math.exp %113 : vector<16x10xf32>
    %115 = arith.select %111, %114, %108 : vector<16x10xi1>, vector<16x10xf32>
    %c0_48 = arith.constant 0 : index
    %c0_49 = arith.constant 0 : index
    %116 = vector.load %arg10[%c0_48, %c0_49] : memref<16x10xf32, #tpu.memory_space<vmem>>, vector<16x10xf32>
    tpu.vector_store %arg10[%c0_48, %c0_49], %115 {strides = array<i32>} : memref<16x10xf32, #tpu.memory_space<vmem>>, vector<16x10xf32>,
    return
  }
  func.func @transform_0(%arg0: i32) -> (i32, i32) {
    %c0_i32 = arith.constant 0 : i32
    %c0_i32_0 = arith.constant 0 : i32
    return %arg0, %c0_i32 : i32, i32
  }
  func.func @transform_1(%arg0: i32) -> (i32, i32) {
    %c0_i32 = arith.constant 0 : i32
    %c0_i32_0 = arith.constant 0 : i32
    %c0_i32_1 = arith.constant 0 : i32
    return %c0_i32, %c0_i32_0 : i32, i32
  }
  func.func @transform_2(%arg0: i32) -> (i32, i32) {
    %c0_i32 = arith.constant 0 : i32
    %c0_i32_0 = arith.constant 0 : i32
    %c0_i32_1 = arith.constant 0 : i32
    return %c0_i32, %c0_i32_0 : i32, i32
  }
  func.func @transform_3(%arg0: i32) -> (i32, i32) {
    %c0_i32 = arith.constant 0 : i32
    %c0_i32_0 = arith.constant 0 : i32
    %c0_i32_1 = arith.constant 0 : i32
    return %c0_i32, %c0_i32_0 : i32, i32
  }
  func.func @transform_4(%arg0: i32) -> (i32, i32) {
    %c0_i32 = arith.constant 0 : i32
    %c0_i32_0 = arith.constant 0 : i32
    %c0_i32_1 = arith.constant 0 : i32
    return %c0_i32, %c0_i32_0 : i32, i32
  }
  func.func @transform_5(%arg0: i32) -> (i32, i32) {
    %c0_i32 = arith.constant 0 : i32
    %c0_i32_0 = arith.constant 0 : i32
    %c0_i32_1 = arith.constant 0 : i32
    return %c0_i32, %c0_i32_0 : i32, i32
  }
  func.func @transform_6(%arg0: i32) -> (i32, i32) {
    %c0_i32 = arith.constant 0 : i32
    %c0_i32_0 = arith.constant 0 : i32
    %c0_i32_1 = arith.constant 0 : i32
    return %c0_i32, %c0_i32_0 : i32, i32
  }
  func.func @transform_7(%arg0: i32) -> (i32, i32) {
    %c0_i32 = arith.constant 0 : i32
    %c0_i32_0 = arith.constant 0 : i32
    %c0_i32_1 = arith.constant 0 : i32
    return %c0_i32, %c0_i32_0 : i32, i32
  }
  func.func @transform_8(%arg0: i32) -> (i32, i32) {
    %c0_i32 = arith.constant 0 : i32
    %c0_i32_0 = arith.constant 0 : i32
    %c0_i32_1 = arith.constant 0 : i32
    return %c0_i32, %c0_i32_0 : i32, i32
  }
  func.func @transform_9(%arg0: i32) -> (i32, i32) {
    %c0_i32 = arith.constant 0 : i32
    %c0_i32_0 = arith.constant 0 : i32
    return %arg0, %c0_i32 : i32, i32
  }
}

</mosaic_0001>

<llo_original>
// kernel: modelnet_forward.1
$region0: #{modelnet_forward.1}
  #allocation0 [shape = 'u32[]', space=smem, size = 0x4, offset = 0x4, fixed_abs, tag = 'smem constant byte address 0x4 - core index']
  #allocation1 [shape = 'u32[144,128]{1,0:T(1,128)}', space=vmem, size = 0x12000, scoped, tag = 'internal scratch']
  %s0 = inlined_call_operand.vmem [shape: f32[16,6], index: 0, kind: input, shape index: {}]
  %s1 = inlined_call_operand.vmem [shape: bf16[6,256], index: 1, kind: input, shape index: {}]
  %s2 = inlined_call_operand.vmem [shape: f32[1,256], index: 2, kind: input, shape index: {}]
  %s3 = inlined_call_operand.vmem [shape: bf16[256,256], index: 3, kind: input, shape index: {}]
  %s4 = inlined_call_operand.vmem [shape: f32[1,256], index: 4, kind: input, shape index: {}]
  %s5 = inlined_call_operand.vmem [shape: bf16[256,256], index: 5, kind: input, shape index: {}]
  %s6 = inlined_call_operand.vmem [shape: f32[1,256], index: 6, kind: input, shape index: {}]
  %s7 = inlined_call_operand.vmem [shape: bf16[256,10], index: 7, kind: input, shape index: {}]
  %s8 = inlined_call_operand.vmem [shape: f32[1,10], index: 8, kind: input, shape index: {}]
  %s9 = inlined_call_operand.vmem [shape: f32[16,10], index: 9, kind: output, shape index: {}]
  %s10 = sld [smem:[#allocation0]]
  $region46: #{modelnet_forward.1} parent=0
    _
  %s12 = ssub.s32 1, %s10
  %s13 = scalar_select 0, %s12, %s10
  // Predicated region
  $region2: #{modelnet_forward.1} parent=0 // pred_check
    _
  $region3: #{modelnet_forward.1} parent=0 // pred_check_branch
    %15 = sbr.rel (0) target = $region5
  $region4: #{modelnet_forward.1} parent=0 // pred_region
    _
  $region5: #{modelnet_forward.1} parent=0 // pred_fallthru
    _
  // Predicated region
  $region6: #{modelnet_forward.1} parent=0 // pred_check
    _
  $region7: #{modelnet_forward.1} parent=0 // pred_check_branch
    %17 = sbr.rel (0) target = $region9
  $region8: #{modelnet_forward.1} parent=0 // pred_region
    _
  $region9: #{modelnet_forward.1} parent=0 // pred_fallthru
    _
  // Predicated region
  $region10: #{modelnet_forward.1} parent=0 // pred_check
    _
  $region11: #{modelnet_forward.1} parent=0 // pred_check_branch
    %19 = sbr.rel (0) target = $region13
  $region12: #{modelnet_forward.1} parent=0 // pred_region
    _
  $region13: #{modelnet_forward.1} parent=0 // pred_fallthru
    _
  // Predicated region
  $region14: #{modelnet_forward.1} parent=0 // pred_check
    _
  $region15: #{modelnet_forward.1} parent=0 // pred_check_branch
    %21 = sbr.rel (0) target = $region17
  $region16: #{modelnet_forward.1} parent=0 // pred_region
    _
  $region17: #{modelnet_forward.1} parent=0 // pred_fallthru
    _
  // Predicated region
  $region18: #{modelnet_forward.1} parent=0 // pred_check
    _
  $region19: #{modelnet_forward.1} parent=0 // pred_check_branch
    %23 = sbr.rel (0) target = $region21
  $region20: #{modelnet_forward.1} parent=0 // pred_region
    _
  $region21: #{modelnet_forward.1} parent=0 // pred_fallthru
    _
  // Predicated region
  $region22: #{modelnet_forward.1} parent=0 // pred_check
    _
  $region23: #{modelnet_forward.1} parent=0 // pred_check_branch
    %25 = sbr.rel (0) target = $region25
  $region24: #{modelnet_forward.1} parent=0 // pred_region
    _
  $region25: #{modelnet_forward.1} parent=0 // pred_fallthru
    _
  // Predicated region
  $region26: #{modelnet_forward.1} parent=0 // pred_check
    _
  $region27: #{modelnet_forward.1} parent=0 // pred_check_branch
    %27 = sbr.rel (0) target = $region29
  $region28: #{modelnet_forward.1} parent=0 // pred_region
    _
  $region29: #{modelnet_forward.1} parent=0 // pred_fallthru
    _
  // Predicated region
  $region30: #{modelnet_forward.1} parent=0 // pred_check
    _
  $region31: #{modelnet_forward.1} parent=0 // pred_check_branch
    %29 = sbr.rel (0) target = $region33
  $region32: #{modelnet_forward.1} parent=0 // pred_region
    _
  $region33: #{modelnet_forward.1} parent=0 // pred_fallthru
    _
  // Predicated region
  $region34: #{modelnet_forward.1} parent=0 // pred_check
    _
  $region35: #{modelnet_forward.1} parent=0 // pred_check_branch
    %31 = sbr.rel (0) target = $region37
  $region36: #{modelnet_forward.1} parent=0 // pred_region
    _
  $region37: #{modelnet_forward.1} parent=0 // pred_fallthru
    _
  %v33 = vld [vmem:[%s0] sm:$0xff]
  %v34 = vld [vmem:[%s0 + $0x8] sm:$0xff]
  %v35 = vpack.c.bf16 %v34, %v33
  %v36 = vld [vmem:[%s1] sm:$0x77]
  %v37 = vld [vmem:[%s2] sm:$0x3]
  %v39 = vlaneseq
  %v40 = vshrl.u32 %v39, 7
  %v41 = vsub.s32 0, %v40
  %v42 = vrot.slane %v37, %v41
  %v43 = vlaneseq
  %v44 = vshrl.u32 %v43, 7
  %v45 = vsub.s32 1, %v44
  %v46 = vrot.slane %v37, %v45
  %v50 = vunpack.c.l.b16 %v36
  %v51 = vunpack.c.h.b16 %v36
  %v52 = vpack.c.b16 %v50, %v50
  %v53 = vpack.c.b16 %v51, %v51
  %vm54 = vcmask 48128
  %v56 = vsel %vm54, %v35, 0
  %vm58 = vcmask 1042432
  %v60 = vsel %vm58, %v52, 0
  %v63 = vsel %vm58, %v53, 0
  %65 = vmatprep.subr.bf16.mxu0 %v63
  %66 = vmatpush1.bf16.msra.mxu0 %v60
  %67 = vmatprep.subr.bf16.mxu0 0
  %68 = vmatpush1.bf16.msra.mxu0 0
  %69 = vmatprep.subr.bf16.mxu0 0
  %70 = vmatpush1.bf16.msra.mxu0 0
  %71 = vmatprep.subr.bf16.mxu0 0
  %72 = vmatpush1.bf16.msra.mxu0 0
  %73 = vmatprep.subr.bf16.mxu0 0
  %74 = vmatpush1.bf16.msra.mxu0 0
  %75 = vmatprep.subr.bf16.mxu0 0
  %76 = vmatpush1.bf16.msra.mxu0 0
  %77 = vmatprep.subr.bf16.mxu0 0
  %78 = vmatpush1.bf16.msra.mxu0 0
  %79 = vmatprep.subr.bf16.mxu0 0
  %80 = vmatpush1.bf16.msra.mxu0 0
  %81 = vmatprep.subr.bf16.mxu0 0
  %82 = vmatpush1.bf16.msra.mxu0 0
  %83 = vmatprep.subr.bf16.mxu0 0
  %84 = vmatpush1.bf16.msra.mxu0 0
  %85 = vmatprep.subr.bf16.mxu0 0
  %86 = vmatpush1.bf16.msra.mxu0 0
  %87 = vmatprep.subr.bf16.mxu0 0
  %88 = vmatpush1.bf16.msra.mxu0 0
  %89 = vmatprep.subr.bf16.mxu0 0
  %90 = vmatpush1.bf16.msra.mxu0 0
  %91 = vmatprep.subr.bf16.mxu0 0
  %92 = vmatpush1.bf16.msra.mxu0 0
  %93 = vmatprep.subr.bf16.mxu0 0
  %94 = vmatpush1.bf16.msra.mxu0 0
  %95 = vmatprep.subr.bf16.mxu0 0
  %96 = vmatpush1.bf16.msra.mxu0 0
  %97 = vmatprep.mubr.bf16.mxu0 0
  %98 = vmatmul.mubr.bf16.gmra.mrb[0].mxu0 %v56
  %v99 = vpop.f32.mrb[0].mxu0
  %v100 = vadd.f32 %v42, %v99
  %v101 = vpop.f32.mrb[0].mxu0
  %v102 = vadd.f32 %v46, %v101
  %v103 = vpop.f32.mrb[0].mxu0
  %v104 = vadd.f32 %v42, %v103
  %v105 = vpop.f32.mrb[0].mxu0
  %v106 = vadd.f32 %v46, %v105
  %107 = vdwg.mxu0
  %v108 = vadd.f32 %v100, %v102
  %109 = vadd.xlane.f32.xlu0 %v108
  %v110 = vpop.xlane.xlu0 %109
  %v111 = vadd.f32 %v104, %v106
  %112 = vadd.xlane.f32.xlu0 %v111
  %v113 = vpop.xlane.xlu0 %112
  %v114 = vrcp.pop 256.0
  %v115 = vmul.f32 %v110, %v114
  %v116 = vmul.f32 %v113, %v114
  %v117 = vmul.f32 %v100, %v100
  %v118 = vmul.f32 %v102, %v102
  %v119 = vmul.f32 %v104, %v104
  %v120 = vmul.f32 %v106, %v106
  %v121 = vadd.f32 %v117, %v118
  %122 = vadd.xlane.f32.xlu0 %v121
  %v123 = vpop.xlane.xlu0 %122
  %v124 = vadd.f32 %v119, %v120
  %125 = vadd.xlane.f32.xlu0 %v124
  %v126 = vpop.xlane.xlu0 %125
  %v127 = vmul.f32 %v123, %v114
  %v128 = vmul.f32 %v126, %v114
  %v129 = vmul.f32 %v115, %v115
  %v130 = vmul.f32 %v116, %v116
  %v131 = vsub.f32 %v127, %v129
  %v132 = vsub.f32 %v128, %v130
  %v133 = vmax.f32 %v131, 0.0
  %v134 = vmax.f32 %v132, 0.0
  %v135 = vsub.f32 %v100, %v115
  %v136 = vsub.f32 %v102, %v115
  %v137 = vsub.f32 %v104, %v116
  %v138 = vsub.f32 %v106, %v116
  %v139 = vadd.f32 %v133, 1e-05
  %v140 = vadd.f32 %v134, 1e-05
  %v141 = vrsqrt.pop %v139
  %v142 = vrsqrt.pop %v140
  %v143 = vmul.f32 %v135, %v141
  %v144 = vmul.f32 %v136, %v141
  %v145 = vmul.f32 %v137, %v142
  %v146 = vmul.f32 %v138, %v142
  %v147 = vmul.f32 %v143, 0.5
  %v148 = vmul.f32 %v144, 0.5
  %v149 = vmul.f32 %v145, 0.5
  %v150 = vmul.f32 %v146, 0.5
  %v151 = vmul.f32 %v143, 0.70710677
  %v152 = vmul.f32 %v144, 0.70710677
  %v153 = vmul.f32 %v145, 0.70710677
  %v154 = vmul.f32 %v146, 0.70710677
  %v155 = verf.f32.pop %v151
  %v156 = verf.f32.pop %v152
  %v157 = verf.f32.pop %v153
  %v158 = verf.f32.pop %v154
  %v159 = vadd.f32 %v155, 1.0
  %v160 = vadd.f32 %v156, 1.0
  %v161 = vadd.f32 %v157, 1.0
  %v162 = vadd.f32 %v158, 1.0
  %v163 = vmul.f32 %v147, %v159
  %v164 = vmul.f32 %v148, %v160
  %v165 = vmul.f32 %v149, %v161
  %v166 = vmul.f32 %v150, %v162
  %v167 = vpack.c.bf16 %v165, %v163
  %v168 = vpack.c.bf16 %v166, %v164
  %v169 = vld [vmem:[%s3] sm:$0xff]
  %v170 = vld [vmem:[%s3 + $0x8] sm:$0xff]
  %v171 = vld [vmem:[%s3 + $0x10] sm:$0xff]
  %v172 = vld [vmem:[%s3 + $0x18] sm:$0xff]
  %v173 = vld [vmem:[%s3 + $0x20] sm:$0xff]
  %v174 = vld [vmem:[%s3 + $0x28] sm:$0xff]
  %v175 = vld [vmem:[%s3 + $0x30] sm:$0xff]
  %v176 = vld [vmem:[%s3 + $0x38] sm:$0xff]
  %v177 = vld [vmem:[%s3 + $0x40] sm:$0xff]
  %v178 = vld [vmem:[%s3 + $0x48] sm:$0xff]
  %v179 = vld [vmem:[%s3 + $0x50] sm:$0xff]
  %v180 = vld [vmem:[%s3 + $0x58] sm:$0xff]
  %v181 = vld [vmem:[%s3 + $0x60] sm:$0xff]
  %v182 = vld [vmem:[%s3 + $0x68] sm:$0xff]
  %v183 = vld [vmem:[%s3 + $0x70] sm:$0xff]
  %v184 = vld [vmem:[%s3 + $0x78] sm:$0xff]
  %v185 = vld [vmem:[%s3 + $0x80] sm:$0xff]
  %v186 = vld [vmem:[%s3 + $0x88] sm:$0xff]
  %v187 = vld [vmem:[%s3 + $0x90] sm:$0xff]
  %v188 = vld [vmem:[%s3 + $0x98] sm:$0xff]
  %v189 = vld [vmem:[%s3 + $0xa0] sm:$0xff]
  %v190 = vld [vmem:[%s3 + $0xa8] sm:$0xff]
  %v191 = vld [vmem:[%s3 + $0xb0] sm:$0xff]
  %v192 = vld [vmem:[%s3 + $0xb8] sm:$0xff]
  %v193 = vld [vmem:[%s3 + $0xc0] sm:$0xff]
  %v194 = vld [vmem:[%s3 + $0xc8] sm:$0xff]
  %v195 = vld [vmem:[%s3 + $0xd0] sm:$0xff]
  %v196 = vld [vmem:[%s3 + $0xd8] sm:$0xff]
  %v197 = vld [vmem:[%s3 + $0xe0] sm:$0xff]
  %v198 = vld [vmem:[%s3 + $0xe8] sm:$0xff]
  %v199 = vld [vmem:[%s3 + $0xf0] sm:$0xff]
  %v200 = vld [vmem:[%s3 + $0xf8] sm:$0xff]
  %v201 = vld [vmem:[%s4] sm:$0x3]
  %v203 = vlaneseq
  %v204 = vshrl.u32 %v203, 7
  %v205 = vsub.s32 0, %v204
  %v206 = vrot.slane %v201, %v205
  %v207 = vlaneseq
  %v208 = vshrl.u32 %v207, 7
  %v209 = vsub.s32 1, %v208
  %v210 = vrot.slane %v201, %v209
  %v245 = vunpack.c.l.b16 %v169
  %v246 = vunpack.c.h.b16 %v169
  %v247 = vunpack.c.l.b16 %v170
  %v248 = vunpack.c.h.b16 %v170
  %v249 = vunpack.c.l.b16 %v171
  %v250 = vunpack.c.h.b16 %v171
  %v251 = vunpack.c.l.b16 %v172
  %v252 = vunpack.c.h.b16 %v172
  %v253 = vunpack.c.l.b16 %v173
  %v254 = vunpack.c.h.b16 %v173
  %v255 = vunpack.c.l.b16 %v174
  %v256 = vunpack.c.h.b16 %v174
  %v257 = vunpack.c.l.b16 %v175
  %v258 = vunpack.c.h.b16 %v175
  %v259 = vunpack.c.l.b16 %v176
  %v260 = vunpack.c.h.b16 %v176
  %v261 = vunpack.c.l.b16 %v177
  %v262 = vunpack.c.h.b16 %v177
  %v263 = vunpack.c.l.b16 %v178
  %v264 = vunpack.c.h.b16 %v178
  %v265 = vunpack.c.l.b16 %v179
  %v266 = vunpack.c.h.b16 %v179
  %v267 = vunpack.c.l.b16 %v180
  %v268 = vunpack.c.h.b16 %v180
  %v269 = vunpack.c.l.b16 %v181
  %v270 = vunpack.c.h.b16 %v181
  %v271 = vunpack.c.l.b16 %v182
  %v272 = vunpack.c.h.b16 %v182
  %v273 = vunpack.c.l.b16 %v183
  %v274 = vunpack.c.h.b16 %v183
  %v275 = vunpack.c.l.b16 %v184
  %v276 = vunpack.c.h.b16 %v184
  %v277 = vunpack.c.l.b16 %v185
  %v278 = vunpack.c.h.b16 %v185
  %v279 = vunpack.c.l.b16 %v186
  %v280 = vunpack.c.h.b16 %v186
  %v281 = vunpack.c.l.b16 %v187
  %v282 = vunpack.c.h.b16 %v187
  %v283 = vunpack.c.l.b16 %v188
  %v284 = vunpack.c.h.b16 %v188
  %v285 = vunpack.c.l.b16 %v189
  %v286 = vunpack.c.h.b16 %v189
  %v287 = vunpack.c.l.b16 %v190
  %v288 = vunpack.c.h.b16 %v190
  %v289 = vunpack.c.l.b16 %v191
  %v290 = vunpack.c.h.b16 %v191
  %v291 = vunpack.c.l.b16 %v192
  %v292 = vunpack.c.h.b16 %v192
  %v293 = vunpack.c.l.b16 %v193
  %v294 = vunpack.c.h.b16 %v193
  %v295 = vunpack.c.l.b16 %v194
  %v296 = vunpack.c.h.b16 %v194
  %v297 = vunpack.c.l.b16 %v195
  %v298 = vunpack.c.h.b16 %v195
  %v299 = vunpack.c.l.b16 %v196
  %v300 = vunpack.c.h.b16 %v196
  %v301 = vunpack.c.l.b16 %v197
  %v302 = vunpack.c.h.b16 %v197
  %v303 = vunpack.c.l.b16 %v198
  %v304 = vunpack.c.h.b16 %v198
  %v305 = vunpack.c.l.b16 %v199
  %v306 = vunpack.c.h.b16 %v199
  %v307 = vunpack.c.l.b16 %v200
  %v308 = vunpack.c.h.b16 %v200
  %v309 = vpack.c.b16 %v247, %v245
  %v310 = vpack.c.b16 %v248, %v246
  %v311 = vpack.c.b16 %v251, %v249
  %v312 = vpack.c.b16 %v252, %v250
  %v313 = vpack.c.b16 %v255, %v253
  %v314 = vpack.c.b16 %v256, %v254
  %v315 = vpack.c.b16 %v259, %v257
  %v316 = vpack.c.b16 %v260, %v258
  %v317 = vpack.c.b16 %v263, %v261
  %v318 = vpack.c.b16 %v264, %v262
  %v319 = vpack.c.b16 %v267, %v265
  %v320 = vpack.c.b16 %v268, %v266
  %v321 = vpack.c.b16 %v271, %v269
  %v322 = vpack.c.b16 %v272, %v270
  %v323 = vpack.c.b16 %v275, %v273
  %v324 = vpack.c.b16 %v276, %v274
  %v325 = vpack.c.b16 %v279, %v277
  %v326 = vpack.c.b16 %v280, %v278
  %v327 = vpack.c.b16 %v283, %v281
  %v328 = vpack.c.b16 %v284, %v282
  %v329 = vpack.c.b16 %v287, %v285
  %v330 = vpack.c.b16 %v288, %v286
  %v331 = vpack.c.b16 %v291, %v289
  %v332 = vpack.c.b16 %v292, %v290
  %v333 = vpack.c.b16 %v295, %v293
  %v334 = vpack.c.b16 %v296, %v294
  %v335 = vpack.c.b16 %v299, %v297
  %v336 = vpack.c.b16 %v300, %v298
  %v337 = vpack.c.b16 %v303, %v301
  %v338 = vpack.c.b16 %v304, %v302
  %v339 = vpack.c.b16 %v307, %v305
  %v340 = vpack.c.b16 %v308, %v306
  %373 = vmatprep.subr.bf16.mxu0 %v310
  %374 = vmatpush1.bf16.msra.mxu0 %v309
  %375 = vmatprep.subr.bf16.mxu0 %v312
  %376 = vmatpush1.bf16.msra.mxu0 %v311
  %377 = vmatprep.subr.bf16.mxu0 %v314
  %378 = vmatpush1.bf16.msra.mxu0 %v313
  %379 = vmatprep.subr.bf16.mxu0 %v316
  %380 = vmatpush1.bf16.msra.mxu0 %v315
  %381 = vmatprep.subr.bf16.mxu0 %v318
  %382 = vmatpush1.bf16.msra.mxu0 %v317
  %383 = vmatprep.subr.bf16.mxu0 %v320
  %384 = vmatpush1.bf16.msra.mxu0 %v319
  %385 = vmatprep.subr.bf16.mxu0 %v322
  %386 = vmatpush1.bf16.msra.mxu0 %v321
  %387 = vmatprep.subr.bf16.mxu0 %v324
  %388 = vmatpush1.bf16.msra.mxu0 %v323
  %389 = vmatprep.subr.bf16.mxu0 %v326
  %390 = vmatpush1.bf16.msra.mxu0 %v325
  %391 = vmatprep.subr.bf16.mxu0 %v328
  %392 = vmatpush1.bf16.msra.mxu0 %v327
  %393 = vmatprep.subr.bf16.mxu0 %v330
  %394 = vmatpush1.bf16.msra.mxu0 %v329
  %395 = vmatprep.subr.bf16.mxu0 %v332
  %396 = vmatpush1.bf16.msra.mxu0 %v331
  %397 = vmatprep.subr.bf16.mxu0 %v334
  %398 = vmatpush1.bf16.msra.mxu0 %v333
  %399 = vmatprep.subr.bf16.mxu0 %v336
  %400 = vmatpush1.bf16.msra.mxu0 %v335
  %401 = vmatprep.subr.bf16.mxu0 %v338
  %402 = vmatpush1.bf16.msra.mxu0 %v337
  %403 = vmatprep.subr.bf16.mxu0 %v340
  %404 = vmatpush1.bf16.msra.mxu0 %v339
  %405 = vmatprep.mubr.bf16.mxu0 %v168
  %406 = vmatmul.mubr.bf16.gmra.mrb[0].mxu0 %v167
  %v407 = vpop.f32.mrb[0].mxu0
  %v408 = vadd.f32 %v206, %v407
  %v409 = vpop.f32.mrb[0].mxu0
  %v410 = vadd.f32 %v210, %v409
  %v411 = vpop.f32.mrb[0].mxu0
  %v412 = vadd.f32 %v206, %v411
  %v413 = vpop.f32.mrb[0].mxu0
  %v414 = vadd.f32 %v210, %v413
  %415 = vdwg.mxu0
  %v416 = vadd.f32 %v408, %v410
  %417 = vadd.xlane.f32.xlu0 %v416
  %v418 = vpop.xlane.xlu0 %417
  %v419 = vadd.f32 %v412, %v414
  %420 = vadd.xlane.f32.xlu0 %v419
  %v421 = vpop.xlane.xlu0 %420
  %v422 = vmul.f32 %v418, %v114
  %v423 = vmul.f32 %v421, %v114
  %v424 = vmul.f32 %v408, %v408
  %v425 = vmul.f32 %v410, %v410
  %v426 = vmul.f32 %v412, %v412
  %v427 = vmul.f32 %v414, %v414
  %v428 = vadd.f32 %v424, %v425
  %429 = vadd.xlane.f32.xlu0 %v428
  %v430 = vpop.xlane.xlu0 %429
  %v431 = vadd.f32 %v426, %v427
  %432 = vadd.xlane.f32.xlu0 %v431
  %v433 = vpop.xlane.xlu0 %432
  %v434 = vmul.f32 %v430, %v114
  %v435 = vmul.f32 %v433, %v114
  %v436 = vmul.f32 %v422, %v422
  %v437 = vmul.f32 %v423, %v423
  %v438 = vsub.f32 %v434, %v436
  %v439 = vsub.f32 %v435, %v437
  %v440 = vmax.f32 %v438, 0.0
  %v441 = vmax.f32 %v439, 0.0
  %v442 = vsub.f32 %v408, %v422
  %v443 = vsub.f32 %v410, %v422
  %v444 = vsub.f32 %v412, %v423
  %v445 = vsub.f32 %v414, %v423
  %v446 = vadd.f32 %v440, 1e-05
  %v447 = vadd.f32 %v441, 1e-05
  %v448 = vrsqrt.pop %v446
  %v449 = vrsqrt.pop %v447
  %v450 = vmul.f32 %v442, %v448
  %v451 = vmul.f32 %v443, %v448
  %v452 = vmul.f32 %v444, %v449
  %v453 = vmul.f32 %v445, %v449
  %v454 = vmul.f32 %v450, 0.5
  %v455 = vmul.f32 %v451, 0.5
  %v456 = vmul.f32 %v452, 0.5
  %v457 = vmul.f32 %v453, 0.5
  %v458 = vmul.f32 %v450, 0.70710677
  %v459 = vmul.f32 %v451, 0.70710677
  %v460 = vmul.f32 %v452, 0.70710677
  %v461 = vmul.f32 %v453, 0.70710677
  %v462 = verf.f32.pop %v458
  %v463 = verf.f32.pop %v459
  %v464 = verf.f32.pop %v460
  %v465 = verf.f32.pop %v461
  %v466 = vadd.f32 %v462, 1.0
  %v467 = vadd.f32 %v463, 1.0
  %v468 = vadd.f32 %v464, 1.0
  %v469 = vadd.f32 %v465, 1.0
  %v470 = vmul.f32 %v454, %v466
  %v471 = vmul.f32 %v455, %v467
  %v472 = vmul.f32 %v456, %v468
  %v473 = vmul.f32 %v457, %v469
  %v474 = vpack.c.bf16 %v472, %v470
  %v475 = vpack.c.bf16 %v473, %v471
  %v476 = vld [vmem:[%s5] sm:$0xff]
  %v477 = vld [vmem:[%s5 + $0x8] sm:$0xff]
  %v478 = vld [vmem:[%s5 + $0x10] sm:$0xff]
  %v479 = vld [vmem:[%s5 + $0x18] sm:$0xff]
  %v480 = vld [vmem:[%s5 + $0x20] sm:$0xff]
  %v481 = vld [vmem:[%s5 + $0x28] sm:$0xff]
  %v482 = vld [vmem:[%s5 + $0x30] sm:$0xff]
  %v483 = vld [vmem:[%s5 + $0x38] sm:$0xff]
  %v484 = vld [vmem:[%s5 + $0x40] sm:$0xff]
  %v485 = vld [vmem:[%s5 + $0x48] sm:$0xff]
  %v486 = vld [vmem:[%s5 + $0x50] sm:$0xff]
  %v487 = vld [vmem:[%s5 + $0x58] sm:$0xff]
  %v488 = vld [vmem:[%s5 + $0x60] sm:$0xff]
  %v489 = vld [vmem:[%s5 + $0x68] sm:$0xff]
  %v490 = vld [vmem:[%s5 + $0x70] sm:$0xff]
  %v491 = vld [vmem:[%s5 + $0x78] sm:$0xff]
  %v492 = vld [vmem:[%s5 + $0x80] sm:$0xff]
  %v493 = vld [vmem:[%s5 + $0x88] sm:$0xff]
  %v494 = vld [vmem:[%s5 + $0x90] sm:$0xff]
  %v495 = vld [vmem:[%s5 + $0x98] sm:$0xff]
  %v496 = vld [vmem:[%s5 + $0xa0] sm:$0xff]
  %v497 = vld [vmem:[%s5 + $0xa8] sm:$0xff]
  %v498 = vld [vmem:[%s5 + $0xb0] sm:$0xff]
  %v499 = vld [vmem:[%s5 + $0xb8] sm:$0xff]
  %v500 = vld [vmem:[%s5 + $0xc0] sm:$0xff]
  %v501 = vld [vmem:[%s5 + $0xc8] sm:$0xff]
  %v502 = vld [vmem:[%s5 + $0xd0] sm:$0xff]
  %v503 = vld [vmem:[%s5 + $0xd8] sm:$0xff]
  %v504 = vld [vmem:[%s5 + $0xe0] sm:$0xff]
  %v505 = vld [vmem:[%s5 + $0xe8] sm:$0xff]
  %v506 = vld [vmem:[%s5 + $0xf0] sm:$0xff]
  %v507 = vld [vmem:[%s5 + $0xf8] sm:$0xff]
  %v508 = vld [vmem:[%s6] sm:$0x3]
  %v510 = vlaneseq
  %v511 = vshrl.u32 %v510, 7
  %v512 = vsub.s32 0, %v511
  %v513 = vrot.slane %v508, %v512
  %v514 = vlaneseq
  %v515 = vshrl.u32 %v514, 7
  %v516 = vsub.s32 1, %v515
  %v517 = vrot.slane %v508, %v516
  %v552 = vunpack.c.l.b16 %v476
  %v553 = vunpack.c.h.b16 %v476
  %v554 = vunpack.c.l.b16 %v477
  %v555 = vunpack.c.h.b16 %v477
  %v556 = vunpack.c.l.b16 %v478
  %v557 = vunpack.c.h.b16 %v478
  %v558 = vunpack.c.l.b16 %v479
  %v559 = vunpack.c.h.b16 %v479
  %v560 = vunpack.c.l.b16 %v480
  %v561 = vunpack.c.h.b16 %v480
  %v562 = vunpack.c.l.b16 %v481
  %v563 = vunpack.c.h.b16 %v481
  %v564 = vunpack.c.l.b16 %v482
  %v565 = vunpack.c.h.b16 %v482
  %v566 = vunpack.c.l.b16 %v483
  %v567 = vunpack.c.h.b16 %v483
  %v568 = vunpack.c.l.b16 %v484
  %v569 = vunpack.c.h.b16 %v484
  %v570 = vunpack.c.l.b16 %v485
  %v571 = vunpack.c.h.b16 %v485
  %v572 = vunpack.c.l.b16 %v486
  %v573 = vunpack.c.h.b16 %v486
  %v574 = vunpack.c.l.b16 %v487
  %v575 = vunpack.c.h.b16 %v487
  %v576 = vunpack.c.l.b16 %v488
  %v577 = vunpack.c.h.b16 %v488
  %v578 = vunpack.c.l.b16 %v489
  %v579 = vunpack.c.h.b16 %v489
  %v580 = vunpack.c.l.b16 %v490
  %v581 = vunpack.c.h.b16 %v490
  %v582 = vunpack.c.l.b16 %v491
  %v583 = vunpack.c.h.b16 %v491
  %v584 = vunpack.c.l.b16 %v492
  %v585 = vunpack.c.h.b16 %v492
  %v586 = vunpack.c.l.b16 %v493
  %v587 = vunpack.c.h.b16 %v493
  %v588 = vunpack.c.l.b16 %v494
  %v589 = vunpack.c.h.b16 %v494
  %v590 = vunpack.c.l.b16 %v495
  %v591 = vunpack.c.h.b16 %v495
  %v592 = vunpack.c.l.b16 %v496
  %v593 = vunpack.c.h.b16 %v496
  %v594 = vunpack.c.l.b16 %v497
  %v595 = vunpack.c.h.b16 %v497
  %v596 = vunpack.c.l.b16 %v498
  %v597 = vunpack.c.h.b16 %v498
  %v598 = vunpack.c.l.b16 %v499
  %v599 = vunpack.c.h.b16 %v499
  %v600 = vunpack.c.l.b16 %v500
  %v601 = vunpack.c.h.b16 %v500
  %v602 = vunpack.c.l.b16 %v501
  %v603 = vunpack.c.h.b16 %v501
  %v604 = vunpack.c.l.b16 %v502
  %v605 = vunpack.c.h.b16 %v502
  %v606 = vunpack.c.l.b16 %v503
  %v607 = vunpack.c.h.b16 %v503
  %v608 = vunpack.c.l.b16 %v504
  %v609 = vunpack.c.h.b16 %v504
  %v610 = vunpack.c.l.b16 %v505
  %v611 = vunpack.c.h.b16 %v505
  %v612 = vunpack.c.l.b16 %v506
  %v613 = vunpack.c.h.b16 %v506
  %v614 = vunpack.c.l.b16 %v507
  %v615 = vunpack.c.h.b16 %v507
  %v616 = vpack.c.b16 %v554, %v552
  %v617 = vpack.c.b16 %v555, %v553
  %v618 = vpack.c.b16 %v558, %v556
  %v619 = vpack.c.b16 %v559, %v557
  %v620 = vpack.c.b16 %v562, %v560
  %v621 = vpack.c.b16 %v563, %v561
  %v622 = vpack.c.b16 %v566, %v564
  %v623 = vpack.c.b16 %v567, %v565
  %v624 = vpack.c.b16 %v570, %v568
  %v625 = vpack.c.b16 %v571, %v569
  %v626 = vpack.c.b16 %v574, %v572
  %v627 = vpack.c.b16 %v575, %v573
  %v628 = vpack.c.b16 %v578, %v576
  %v629 = vpack.c.b16 %v579, %v577
  %v630 = vpack.c.b16 %v582, %v580
  %v631 = vpack.c.b16 %v583, %v581
  %v632 = vpack.c.b16 %v586, %v584
  %v633 = vpack.c.b16 %v587, %v585
  %v634 = vpack.c.b16 %v590, %v588
  %v635 = vpack.c.b16 %v591, %v589
  %v636 = vpack.c.b16 %v594, %v592
  %v637 = vpack.c.b16 %v595, %v593
  %v638 = vpack.c.b16 %v598, %v596
  %v639 = vpack.c.b16 %v599, %v597
  %v640 = vpack.c.b16 %v602, %v600
  %v641 = vpack.c.b16 %v603, %v601
  %v642 = vpack.c.b16 %v606, %v604
  %v643 = vpack.c.b16 %v607, %v605
  %v644 = vpack.c.b16 %v610, %v608
  %v645 = vpack.c.b16 %v611, %v609
  %v646 = vpack.c.b16 %v614, %v612
  %v647 = vpack.c.b16 %v615, %v613
  %680 = vmatprep.subr.bf16.mxu0 %v617
  %681 = vmatpush1.bf16.msra.mxu0 %v616
  %682 = vmatprep.subr.bf16.mxu0 %v619
  %683 = vmatpush1.bf16.msra.mxu0 %v618
  %684 = vmatprep.subr.bf16.mxu0 %v621
  %685 = vmatpush1.bf16.msra.mxu0 %v620
  %686 = vmatprep.subr.bf16.mxu0 %v623
  %687 = vmatpush1.bf16.msra.mxu0 %v622
  %688 = vmatprep.subr.bf16.mxu0 %v625
  %689 = vmatpush1.bf16.msra.mxu0 %v624
  %690 = vmatprep.subr.bf16.mxu0 %v627
  %691 = vmatpush1.bf16.msra.mxu0 %v626
  %692 = vmatprep.subr.bf16.mxu0 %v629
  %693 = vmatpush1.bf16.msra.mxu0 %v628
  %694 = vmatprep.subr.bf16.mxu0 %v631
  %695 = vmatpush1.bf16.msra.mxu0 %v630
  %696 = vmatprep.subr.bf16.mxu0 %v633
  %697 = vmatpush1.bf16.msra.mxu0 %v632
  %698 = vmatprep.subr.bf16.mxu0 %v635
  %699 = vmatpush1.bf16.msra.mxu0 %v634
  %700 = vmatprep.subr.bf16.mxu0 %v637
  %701 = vmatpush1.bf16.msra.mxu0 %v636
  %702 = vmatprep.subr.bf16.mxu0 %v639
  %703 = vmatpush1.bf16.msra.mxu0 %v638
  %704 = vmatprep.subr.bf16.mxu0 %v641
  %705 = vmatpush1.bf16.msra.mxu0 %v640
  %706 = vmatprep.subr.bf16.mxu0 %v643
  %707 = vmatpush1.bf16.msra.mxu0 %v642
  %708 = vmatprep.subr.bf16.mxu0 %v645
  %709 = vmatpush1.bf16.msra.mxu0 %v644
  %710 = vmatprep.subr.bf16.mxu0 %v647
  %711 = vmatpush1.bf16.msra.mxu0 %v646
  %712 = vmatprep.mubr.bf16.mxu0 %v475
  %713 = vmatmul.mubr.bf16.gmra.mrb[0].mxu0 %v474
  %v714 = vpop.f32.mrb[0].mxu0
  %v715 = vadd.f32 %v513, %v714
  %v716 = vpop.f32.mrb[0].mxu0
  %v717 = vadd.f32 %v517, %v716
  %v718 = vpop.f32.mrb[0].mxu0
  %v719 = vadd.f32 %v513, %v718
  %v720 = vpop.f32.mrb[0].mxu0
  %v721 = vadd.f32 %v517, %v720
  %722 = vdwg.mxu0
  %v723 = vadd.f32 %v715, %v717
  %724 = vadd.xlane.f32.xlu0 %v723
  %v725 = vpop.xlane.xlu0 %724
  %v726 = vadd.f32 %v719, %v721
  %727 = vadd.xlane.f32.xlu0 %v726
  %v728 = vpop.xlane.xlu0 %727
  %v729 = vmul.f32 %v725, %v114
  %v730 = vmul.f32 %v728, %v114
  %v731 = vmul.f32 %v715, %v715
  %v732 = vmul.f32 %v717, %v717
  %v733 = vmul.f32 %v719, %v719
  %v734 = vmul.f32 %v721, %v721
  %v735 = vadd.f32 %v731, %v732
  %736 = vadd.xlane.f32.xlu0 %v735
  %v737 = vpop.xlane.xlu0 %736
  %v738 = vadd.f32 %v733, %v734
  %739 = vadd.xlane.f32.xlu0 %v738
  %v740 = vpop.xlane.xlu0 %739
  %v741 = vmul.f32 %v737, %v114
  %v742 = vmul.f32 %v740, %v114
  %v743 = vmul.f32 %v729, %v729
  %v744 = vmul.f32 %v730, %v730
  %v745 = vsub.f32 %v741, %v743
  %v746 = vsub.f32 %v742, %v744
  %v747 = vmax.f32 %v745, 0.0
  %v748 = vmax.f32 %v746, 0.0
  %v749 = vsub.f32 %v715, %v729
  %v750 = vsub.f32 %v717, %v729
  %v751 = vsub.f32 %v719, %v730
  %v752 = vsub.f32 %v721, %v730
  %v753 = vadd.f32 %v747, 1e-05
  %v754 = vadd.f32 %v748, 1e-05
  %v755 = vrsqrt.pop %v753
  %v756 = vrsqrt.pop %v754
  %v757 = vmul.f32 %v749, %v755
  %v758 = vmul.f32 %v750, %v755
  %v759 = vmul.f32 %v751, %v756
  %v760 = vmul.f32 %v752, %v756
  %v761 = vmul.f32 %v757, 0.5
  %v762 = vmul.f32 %v758, 0.5
  %v763 = vmul.f32 %v759, 0.5
  %v764 = vmul.f32 %v760, 0.5
  %v765 = vmul.f32 %v757, 0.70710677
  %v766 = vmul.f32 %v758, 0.70710677
  %v767 = vmul.f32 %v759, 0.70710677
  %v768 = vmul.f32 %v760, 0.70710677
  %v769 = verf.f32.pop %v765
  %v770 = verf.f32.pop %v766
  %v771 = verf.f32.pop %v767
  %v772 = verf.f32.pop %v768
  %v773 = vadd.f32 %v769, 1.0
  %v774 = vadd.f32 %v770, 1.0
  %v775 = vadd.f32 %v771, 1.0
  %v776 = vadd.f32 %v772, 1.0
  %v777 = vmul.f32 %v761, %v773
  %v778 = vmul.f32 %v762, %v774
  %v779 = vmul.f32 %v763, %v775
  %v780 = vmul.f32 %v764, %v776
  %v781 = vpack.c.bf16 %v779, %v777
  %v782 = vpack.c.bf16 %v780, %v778
  %v783 = vld [vmem:[%s7] sm:$0xf]
  %v784 = vld [vmem:[%s7 + $0x4] sm:$0xf]
  %v785 = vld [vmem:[%s7 + $0x8] sm:$0xf]
  %v786 = vld [vmem:[%s7 + $0xc] sm:$0xf]
  %v787 = vld [vmem:[%s7 + $0x10] sm:$0xf]
  %v788 = vld [vmem:[%s7 + $0x14] sm:$0xf]
  %v789 = vld [vmem:[%s7 + $0x18] sm:$0xf]
  %v790 = vld [vmem:[%s7 + $0x1c] sm:$0xf]
  %v791 = vld [vmem:[%s7 + $0x20] sm:$0xf]
  %v792 = vld [vmem:[%s7 + $0x24] sm:$0xf]
  %v793 = vld [vmem:[%s7 + $0x28] sm:$0xf]
  %v794 = vld [vmem:[%s7 + $0x2c] sm:$0xf]
  %v795 = vld [vmem:[%s7 + $0x30] sm:$0xf]
  %v796 = vld [vmem:[%s7 + $0x34] sm:$0xf]
  %v797 = vld [vmem:[%s7 + $0x38] sm:$0xf]
  %v798 = vld [vmem:[%s7 + $0x3c] sm:$0xf]
  %v799 = vld [vmem:[%s7 + $0x40] sm:$0xf]
  %v800 = vld [vmem:[%s7 + $0x44] sm:$0xf]
  %v801 = vld [vmem:[%s7 + $0x48] sm:$0xf]
  %v802 = vld [vmem:[%s7 + $0x4c] sm:$0xf]
  %v803 = vld [vmem:[%s7 + $0x50] sm:$0xf]
  %v804 = vld [vmem:[%s7 + $0x54] sm:$0xf]
  %v805 = vld [vmem:[%s7 + $0x58] sm:$0xf]
  %v806 = vld [vmem:[%s7 + $0x5c] sm:$0xf]
  %v807 = vld [vmem:[%s7 + $0x60] sm:$0xf]
  %v808 = vld [vmem:[%s7 + $0x64] sm:$0xf]
  %v809 = vld [vmem:[%s7 + $0x68] sm:$0xf]
  %v810 = vld [vmem:[%s7 + $0x6c] sm:$0xf]
  %v811 = vld [vmem:[%s7 + $0x70] sm:$0xf]
  %v812 = vld [vmem:[%s7 + $0x74] sm:$0xf]
  %v813 = vld [vmem:[%s7 + $0x78] sm:$0xf]
  %v814 = vld [vmem:[%s7 + $0x7c] sm:$0xf]
  %v815 = vld [vmem:[%s8] sm:$0x1]
  %v817 = vlaneseq
  %v818 = vshrl.u32 %v817, 7
  %v819 = vsub.s32 0, %v818
  %v820 = vrot.slane %v815, %v819
  %v854 = vunpack.c.l.b16 %v783
  %v855 = vunpack.c.l.b16 %v784
  %v856 = vunpack.c.l.b16 %v785
  %v857 = vunpack.c.l.b16 %v786
  %v858 = vunpack.c.l.b16 %v787
  %v859 = vunpack.c.l.b16 %v788
  %v860 = vunpack.c.l.b16 %v789
  %v861 = vunpack.c.l.b16 %v790
  %v862 = vunpack.c.l.b16 %v791
  %v863 = vunpack.c.l.b16 %v792
  %v864 = vunpack.c.l.b16 %v793
  %v865 = vunpack.c.l.b16 %v794
  %v866 = vunpack.c.l.b16 %v795
  %v867 = vunpack.c.l.b16 %v796
  %v868 = vunpack.c.l.b16 %v797
  %v869 = vunpack.c.l.b16 %v798
  %v870 = vunpack.c.l.b16 %v799
  %v871 = vunpack.c.l.b16 %v800
  %v872 = vunpack.c.l.b16 %v801
  %v873 = vunpack.c.l.b16 %v802
  %v874 = vunpack.c.l.b16 %v803
  %v875 = vunpack.c.l.b16 %v804
  %v876 = vunpack.c.l.b16 %v805
  %v877 = vunpack.c.l.b16 %v806
  %v878 = vunpack.c.l.b16 %v807
  %v879 = vunpack.c.l.b16 %v808
  %v880 = vunpack.c.l.b16 %v809
  %v881 = vunpack.c.l.b16 %v810
  %v882 = vunpack.c.l.b16 %v811
  %v883 = vunpack.c.l.b16 %v812
  %v884 = vunpack.c.l.b16 %v813
  %v885 = vunpack.c.l.b16 %v814
  %v886 = vpack.c.b16 %v855, %v854
  %v887 = vpack.c.b16 %v857, %v856
  %v888 = vpack.c.b16 %v859, %v858
  %v889 = vpack.c.b16 %v861, %v860
  %v890 = vpack.c.b16 %v863, %v862
  %v891 = vpack.c.b16 %v865, %v864
  %v892 = vpack.c.b16 %v867, %v866
  %v893 = vpack.c.b16 %v869, %v868
  %v894 = vpack.c.b16 %v871, %v870
  %v895 = vpack.c.b16 %v873, %v872
  %v896 = vpack.c.b16 %v875, %v874
  %v897 = vpack.c.b16 %v877, %v876
  %v898 = vpack.c.b16 %v879, %v878
  %v899 = vpack.c.b16 %v881, %v880
  %v900 = vpack.c.b16 %v883, %v882
  %v901 = vpack.c.b16 %v885, %v884
  %918 = vmatprep.subr.bf16.mxu0 0
  %919 = vmatpush1.bf16.msra.mxu0 %v886
  %920 = vmatprep.subr.bf16.mxu0 0
  %921 = vmatpush1.bf16.msra.mxu0 %v887
  %922 = vmatprep.subr.bf16.mxu0 0
  %923 = vmatpush1.bf16.msra.mxu0 %v888
  %924 = vmatprep.subr.bf16.mxu0 0
  %925 = vmatpush1.bf16.msra.mxu0 %v889
  %926 = vmatprep.subr.bf16.mxu0 0
  %927 = vmatpush1.bf16.msra.mxu0 %v890
  %928 = vmatprep.subr.bf16.mxu0 0
  %929 = vmatpush1.bf16.msra.mxu0 %v891
  %930 = vmatprep.subr.bf16.mxu0 0
  %931 = vmatpush1.bf16.msra.mxu0 %v892
  %932 = vmatprep.subr.bf16.mxu0 0
  %933 = vmatpush1.bf16.msra.mxu0 %v893
  %934 = vmatprep.subr.bf16.mxu0 0
  %935 = vmatpush1.bf16.msra.mxu0 %v894
  %936 = vmatprep.subr.bf16.mxu0 0
  %937 = vmatpush1.bf16.msra.mxu0 %v895
  %938 = vmatprep.subr.bf16.mxu0 0
  %939 = vmatpush1.bf16.msra.mxu0 %v896
  %940 = vmatprep.subr.bf16.mxu0 0
  %941 = vmatpush1.bf16.msra.mxu0 %v897
  %942 = vmatprep.subr.bf16.mxu0 0
  %943 = vmatpush1.bf16.msra.mxu0 %v898
  %944 = vmatprep.subr.bf16.mxu0 0
  %945 = vmatpush1.bf16.msra.mxu0 %v899
  %946 = vmatprep.subr.bf16.mxu0 0
  %947 = vmatpush1.bf16.msra.mxu0 %v900
  %948 = vmatprep.subr.bf16.mxu0 0
  %949 = vmatpush1.bf16.msra.mxu0 %v901
  %950 = vmatprep.mubr.bf16.mxu0 %v782
  %951 = vmatmul.mubr.bf16.gmra.mrb[0].mxu0 %v781
  %v952 = vpop.f32.mrb[0].mxu0
  %v953 = vadd.f32 %v820, %v952
  %v954 = vpop.f32.mrb[0].mxu0
  %v955 = vpop.f32.mrb[0].mxu0
  %v956 = vadd.f32 %v820, %v955
  %v957 = vpop.f32.mrb[0].mxu0
  %958 = vdwg.mxu0
  %v959 = vlaneseq
  %v960 = vand.u32 %v959, 127
  %vm961 = vcmp.ge.s32.totalorder %v960, 5
  %v962 = vsel %vm961, %v953, 0.0
  %v963 = vsel %vm961, %v956, 0.0
  %v964 = vmul.f32 %v962, 1.442695
  %v965 = vpow.pop %v964
  %v966 = vmul.f32 %v963, 1.442695
  %v967 = vpow.pop %v966
  %v968 = vsel %vm961, %v965, %v953
  %v969 = vsel %vm961, %v967, %v956
  %vm970 = vcmask 80896
  %971 = vst.msk [vmem:[%s9] sm:$0xff] %vm970, %v968
  %972 = vst.msk [vmem:[%s9 + $0x8] sm:$0xff] %vm970, %v969
  // Predicated region
  $region38: #{modelnet_forward.1} parent=0 // pred_check
    _
  $region39: #{modelnet_forward.1} parent=0 // pred_check_branch
    %974 = sbr.rel (0) target = $region41
  $region40: #{modelnet_forward.1} parent=0 // pred_region
    _
  $region41: #{modelnet_forward.1} parent=0 // pred_fallthru
    _
  // Predicated region
  $region42: #{modelnet_forward.1} parent=0 // pred_check
    _
  $region43: #{modelnet_forward.1} parent=0 // pred_check_branch
    %976 = sbr.rel (0) target = $region45
  $region44: #{modelnet_forward.1} parent=0 // pred_region
    _
  $region45: #{modelnet_forward.1} parent=0 // pred_fallthru
    _

</llo_original>
